<compile_context>
chip_gen: v5e
topology: v5e:2x2
jax: 0.10.0
libtpu: 0.0.40
codegen_flags: <defaults>
</compile_context>

<pallas_src>
import jax
import jax.numpy as jnp
from jax.experimental import pallas as pl
from jax.experimental.pallas import tpu as pltpu


def _cdiv(a, b):
    return (a + b - 1) // b


def _round_up(n, m):
    return ((n + m - 1) // m) * m


def _tensorcores_per_chip():
    """Best-effort detection: v7x has 2 TensorCores per chip; v5e/v6e have 1."""
    try:
        kind = jax.devices()[0].device_kind.lower()
    except Exception:
        return 1
    return 2 if "7" in kind else 1


def _choose_tiles(batch, tile_b_max, n_cores):
    """Pick (rows_per_tile, num_tiles) for the batch grid.

    - Whole batch fits in one tile and there's no second core to feed (or the
      batch is too small to split usefully): one tile of exactly `batch` rows,
      block == full array dims, so NO batch padding at all.
    - Otherwise: tiles are multiples of 16 rows (bf16 sublane packing) and the
      tile count is a multiple of n_cores so both TensorCores get work.
    """
    if batch <= tile_b_max:
        if n_cores > 1 and batch >= 128:
            num_tiles = n_cores
        else:
            return batch, 1
    else:
        num_tiles = _cdiv(batch, tile_b_max)
        if n_cores > 1:
            num_tiles = _round_up(num_tiles, n_cores)
    tb = _round_up(_cdiv(batch, num_tiles), 16)
    return tb, num_tiles


def dqn_kernel(x_ref, w1_ref, b1_ref, w2_ref, b2_ref, w3_ref, b3_ref, o_ref):
    # x arrives f32; cast to the MXU compute dtype in-kernel (hidden under DMA).
    x = x_ref[...].astype(w1_ref.dtype)
    # fc1: Linear + ReLU (bf16 MXU inputs, f32 accumulation, f32 epilogue)
    h1 = jnp.dot(x, w1_ref[...], preferred_element_type=jnp.float32)
    h1 = jnp.maximum(h1 + b1_ref[...], 0.0).astype(w2_ref.dtype)
    # fc2: Linear + ReLU
    h2 = jnp.dot(h1, w2_ref[...], preferred_element_type=jnp.float32)
    h2 = jnp.maximum(h2 + b2_ref[...], 0.0).astype(w3_ref.dtype)
    # fc3: Linear (no activation), stored at the true output width
    o = jnp.dot(h2, w3_ref[...], preferred_element_type=jnp.float32)
    o_ref[...] = (o + b3_ref[...]).astype(o_ref.dtype)


def prepare_params(params, compute_dtype=jnp.bfloat16):
    """One-time weight prep, hoisted out of the forward call: cast weights to
    the MXU compute dtype; keep biases f32 for the f32 epilogue."""
    return {
        "w1": params["w1"].astype(compute_dtype),
        "w2": params["w2"].astype(compute_dtype),
        "w3": params["w3"].astype(compute_dtype),
        "b1": params["b1"].astype(jnp.float32),
        "b2": params["b2"].astype(jnp.float32),
        "b3": params["b3"].astype(jnp.float32),
    }


def dqn_forward(x, prepared, *, tile_b=512, num_tensorcores=None):
    """x: [B, input_size] f32. prepared: output of prepare_params()."""
    w1, b1 = prepared["w1"], prepared["b1"]
    w2, b2 = prepared["w2"], prepared["b2"]
    w3, b3 = prepared["w3"], prepared["b3"]

    B, in_size = x.shape
    h1_size = w1.shape[1]
    h2_size = w2.shape[1]
    out_size = w3.shape[1]

    n_cores = _tensorcores_per_chip() if num_tensorcores is None else num_tensorcores
    tb, num_tiles = _choose_tiles(B, tile_b, n_cores)
    b_pad = tb * num_tiles
    if b_pad != B:
        x = jnp.pad(x, ((0, b_pad - B), (0, 0)))

    flops = 2 * b_pad * (in_size * h1_size + h1_size * h2_size + h2_size * out_size)
    bytes_accessed = (
        x.size * x.dtype.itemsize
        + sum(a.size * a.dtype.itemsize for a in (w1, b1, w2, b2, w3, b3))
        + b_pad * out_size * 4
    )

    def const_spec(shape):
        # Weights/biases: same block every grid step -> DMA'd once, VMEM resident.
        return pl.BlockSpec(shape, lambda i: (0, 0))

    out = pl.pallas_call(
        dqn_kernel,
        out_shape=jax.ShapeDtypeStruct((b_pad, out_size), jnp.float32),
        grid=(num_tiles,),
        in_specs=[
            pl.BlockSpec((tb, in_size), lambda i: (i, 0)),   # x: tiled over batch
            const_spec(w1.shape), const_spec(b1.shape),
            const_spec(w2.shape), const_spec(b2.shape),
            const_spec(w3.shape), const_spec(b3.shape),
        ],
        out_specs=pl.BlockSpec((tb, out_size), lambda i: (i, 0)),
        compiler_params=pltpu.CompilerParams(
            dimension_semantics=("parallel",)),  # shards batch tiles across TCs
        cost_estimate=pl.CostEstimate(
            flops=flops, transcendentals=0, bytes_accessed=bytes_accessed),
    )(x, w1, b1, w2, b2, w3, b3)

    return out if b_pad == B else out[:B]


def init_params(key, input_size, output_size, hidd1_size, hidd2_size):
    """PyTorch-style init: U[-1/sqrt(fan_in), 1/sqrt(fan_in)] for W and b."""
    def linear(key, fan_in, fan_out):
        kw, kb = jax.random.split(key)
        bound = 1.0 / jnp.sqrt(fan_in)
        # stored as [in, out] (transposed w.r.t. nn.Linear.weight)
        w = jax.random.uniform(kw, (fan_in, fan_out), jnp.float32, -bound, bound)
        b = jax.random.uniform(kb, (1, fan_out), jnp.float32, -bound, bound)
        return w, b

    k1, k2, k3 = jax.random.split(key, 3)
    w1, b1 = linear(k1, input_size, hidd1_size)
    w2, b2 = linear(k2, hidd1_size, hidd2_size)
    w3, b3 = linear(k3, hidd2_size, output_size)
    return {"w1": w1, "b1": b1, "w2": w2, "b2": b2, "w3": w3, "b3": b3}


def dqn_reference(x, p, compute_dtype=jnp.bfloat16):
    """Reference mirroring the kernel's precision (bf16 MXU inputs, f32 accum)."""
    def rd(a):
        return a.astype(compute_dtype).astype(jnp.float32)
    h1 = jnp.maximum(rd(x) @ rd(p["w1"]) + p["b1"], 0.0)
    h2 = jnp.maximum(rd(h1) @ rd(p["w2"]) + p["b2"], 0.0)
    return rd(h2) @ rd(p["w3"]) + p["b3"]


if __name__ == "__main__":
    key = jax.random.PRNGKey(0)
    kp, kx1, kx2, kx3 = jax.random.split(key, 4)

    input_size, hidd1_size, hidd2_size, output_size = 32, 64, 64, 16
    params = init_params(kp, input_size, output_size, hidd1_size, hidd2_size)
    prepared = prepare_params(params)   # one-time weight prep (hoisted)

    # Larger batch: one 256-row tile on single-TC chips, 2x128 on 2-TC chips.
    x_big = jax.random.normal(kx1, (256, input_size), jnp.float32)
    out_big = dqn_forward(x_big, prepared)
    jax.block_until_ready(out_big)
    ref_big = dqn_reference(x_big, params)
    assert out_big.shape == (256, output_size)
    assert jnp.allclose(out_big, ref_big, atol=1e-2, rtol=1e-2), "mismatch (B=256)"

    # Small batch: single-tile fast path, no batch padding at all.
    x_small = jax.random.normal(kx2, (8, input_size), jnp.float32)
    out_small = dqn_forward(x_small, prepared)
    jax.block_until_ready(out_small)
    ref_small = dqn_reference(x_small, params)
    assert out_small.shape == (8, output_size)
    assert jnp.allclose(out_small, ref_small, atol=1e-2, rtol=1e-2), "mismatch (B=8)"

    # Awkward batch with a forced 2-TC split: exercises multi-tile + batch padding
    # (B=200 -> 2 tiles of 112 rows) regardless of which chip this runs on.
    x_mid = jax.random.normal(kx3, (200, input_size), jnp.float32)
    out_mid = dqn_forward(x_mid, prepared, num_tensorcores=2)
    jax.block_until_ready(out_mid)
    ref_mid = dqn_reference(x_mid, params)
    assert out_mid.shape == (200, output_size)
    assert jnp.allclose(out_mid, ref_mid, atol=1e-2, rtol=1e-2), "mismatch (B=200)"

    print("KERNEL_OK")
</pallas_src>

<mosaic_0001>
module attributes {stable_mosaic.version = 11 : i64} {
  func.func @dqn_kernel(%arg0: i32, %arg1: memref<256x32xf32, #tpu.memory_space<vmem>>, %arg2: memref<32x64xbf16, #tpu.memory_space<vmem>>, %arg3: memref<1x64xf32, #tpu.memory_space<vmem>>, %arg4: memref<64x64xbf16, #tpu.memory_space<vmem>>, %arg5: memref<1x64xf32, #tpu.memory_space<vmem>>, %arg6: memref<64x16xbf16, #tpu.memory_space<vmem>>, %arg7: memref<1x16xf32, #tpu.memory_space<vmem>>, %arg8: memref<256x16xf32, #tpu.memory_space<vmem>>) attributes {dimension_semantics = [#tpu.dimension_semantics<parallel>], iteration_bounds = array<i64: 1>, scalar_prefetch = 0 : i64, scratch_operands = 0 : i64, tpu.core_type = #tpu.core_type<tc>, window_params = [{transform_indices = @transform_0, window_bounds = array<i64: 256, 32>}, {pipeline_mode = #tpu.pipeline_mode<synchronous>, transform_indices = @transform_1, window_bounds = array<i64: 32, 64>}, {pipeline_mode = #tpu.pipeline_mode<synchronous>, transform_indices = @transform_2, window_bounds = array<i64: 1, 64>}, {pipeline_mode = #tpu.pipeline_mode<synchronous>, transform_indices = @transform_3, window_bounds = array<i64: 64, 64>}, {pipeline_mode = #tpu.pipeline_mode<synchronous>, transform_indices = @transform_4, window_bounds = array<i64: 1, 64>}, {pipeline_mode = #tpu.pipeline_mode<synchronous>, transform_indices = @transform_5, window_bounds = array<i64: 64, 16>}, {pipeline_mode = #tpu.pipeline_mode<synchronous>, transform_indices = @transform_6, window_bounds = array<i64: 1, 16>}, {transform_indices = @transform_7, window_bounds = array<i64: 256, 16>}]} {
    %c0 = arith.constant 0 : index
    %c0_0 = arith.constant 0 : index
    %0 = vector.load %arg1[%c0, %c0_0] : memref<256x32xf32, #tpu.memory_space<vmem>>, vector<256x32xf32>
    %1 = arith.truncf %0 : vector<256x32xf32> to vector<256x32xbf16>
    %c0_1 = arith.constant 0 : index
    %c0_2 = arith.constant 0 : index
    %2 = vector.load %arg2[%c0_1, %c0_2] : memref<32x64xbf16, #tpu.memory_space<vmem>>, vector<32x64xbf16>
    %cst = arith.constant dense<0.000000e+00> : vector<256x64xf32>
    %3 = tpu.matmul %1, %2, %cst {dimension_numbers = #tpu.dot_dimension_numbers<[1], [0], [0], [1], [0, 0, 1, 1], [], []>} : vector<256x32xbf16>, vector<32x64xbf16>, vector<256x64xf32> -> vector<256x64xf32>
    %c0_3 = arith.constant 0 : index
    %c0_4 = arith.constant 0 : index
    %4 = vector.load %arg3[%c0_3, %c0_4] : memref<1x64xf32, #tpu.memory_space<vmem>>, vector<1x64xf32>
    %5 = vector.broadcast %4 : vector<1x64xf32> to vector<256x64xf32>
    %6 = arith.addf %3, %5 : vector<256x64xf32>
    %cst_5 = arith.constant 0.000000e+00 : f32
    %7 = vector.broadcast %cst_5 : f32 to vector<256x64xf32>
    %8 = arith.maximumf %6, %7 : vector<256x64xf32>
    %9 = arith.truncf %8 : vector<256x64xf32> to vector<256x64xbf16>
    %c0_6 = arith.constant 0 : index
    %c0_7 = arith.constant 0 : index
    %10 = vector.load %arg4[%c0_6, %c0_7] : memref<64x64xbf16, #tpu.memory_space<vmem>>, vector<64x64xbf16>
    %cst_8 = arith.constant dense<0.000000e+00> : vector<256x64xf32>
    %11 = tpu.matmul %9, %10, %cst_8 {dimension_numbers = #tpu.dot_dimension_numbers<[1], [0], [0], [1], [0, 0, 1, 1], [], []>} : vector<256x64xbf16>, vector<64x64xbf16>, vector<256x64xf32> -> vector<256x64xf32>
    %c0_9 = arith.constant 0 : index
    %c0_10 = arith.constant 0 : index
    %12 = vector.load %arg5[%c0_9, %c0_10] : memref<1x64xf32, #tpu.memory_space<vmem>>, vector<1x64xf32>
    %13 = vector.broadcast %12 : vector<1x64xf32> to vector<256x64xf32>
    %14 = arith.addf %11, %13 : vector<256x64xf32>
    %cst_11 = arith.constant 0.000000e+00 : f32
    %15 = vector.broadcast %cst_11 : f32 to vector<256x64xf32>
    %16 = arith.maximumf %14, %15 : vector<256x64xf32>
    %17 = arith.truncf %16 : vector<256x64xf32> to vector<256x64xbf16>
    %c0_12 = arith.constant 0 : index
    %c0_13 = arith.constant 0 : index
    %18 = vector.load %arg6[%c0_12, %c0_13] : memref<64x16xbf16, #tpu.memory_space<vmem>>, vector<64x16xbf16>
    %cst_14 = arith.constant dense<0.000000e+00> : vector<256x16xf32>
    %19 = tpu.matmul %17, %18, %cst_14 {dimension_numbers = #tpu.dot_dimension_numbers<[1], [0], [0], [1], [0, 0, 1, 1], [], []>} : vector<256x64xbf16>, vector<64x16xbf16>, vector<256x16xf32> -> vector<256x16xf32>
    %c0_15 = arith.constant 0 : index
    %c0_16 = arith.constant 0 : index
    %20 = vector.load %arg7[%c0_15, %c0_16] : memref<1x16xf32, #tpu.memory_space<vmem>>, vector<1x16xf32>
    %21 = vector.broadcast %20 : vector<1x16xf32> to vector<256x16xf32>
    %22 = arith.addf %19, %21 : vector<256x16xf32>
    %c0_17 = arith.constant 0 : index
    %c0_18 = arith.constant 0 : index
    %23 = vector.load %arg8[%c0_17, %c0_18] : memref<256x16xf32, #tpu.memory_space<vmem>>, vector<256x16xf32>
    tpu.vector_store %arg8[%c0_17, %c0_18], %22 {strides = array<i32>} : memref<256x16xf32, #tpu.memory_space<vmem>>, vector<256x16xf32>,
    return
  }
  func.func @transform_0(%arg0: i32) -> (i32, i32) {
    %c0_i32 = arith.constant 0 : i32
    %c0_i32_0 = arith.constant 0 : i32
    return %arg0, %c0_i32 : i32, i32
  }
  func.func @transform_1(%arg0: i32) -> (i32, i32) {
    %c0_i32 = arith.constant 0 : i32
    %c0_i32_0 = arith.constant 0 : i32
    %c0_i32_1 = arith.constant 0 : i32
    return %c0_i32, %c0_i32_0 : i32, i32
  }
  func.func @transform_2(%arg0: i32) -> (i32, i32) {
    %c0_i32 = arith.constant 0 : i32
    %c0_i32_0 = arith.constant 0 : i32
    %c0_i32_1 = arith.constant 0 : i32
    return %c0_i32, %c0_i32_0 : i32, i32
  }
  func.func @transform_3(%arg0: i32) -> (i32, i32) {
    %c0_i32 = arith.constant 0 : i32
    %c0_i32_0 = arith.constant 0 : i32
    %c0_i32_1 = arith.constant 0 : i32
    return %c0_i32, %c0_i32_0 : i32, i32
  }
  func.func @transform_4(%arg0: i32) -> (i32, i32) {
    %c0_i32 = arith.constant 0 : i32
    %c0_i32_0 = arith.constant 0 : i32
    %c0_i32_1 = arith.constant 0 : i32
    return %c0_i32, %c0_i32_0 : i32, i32
  }
  func.func @transform_5(%arg0: i32) -> (i32, i32) {
    %c0_i32 = arith.constant 0 : i32
    %c0_i32_0 = arith.constant 0 : i32
    %c0_i32_1 = arith.constant 0 : i32
    return %c0_i32, %c0_i32_0 : i32, i32
  }
  func.func @transform_6(%arg0: i32) -> (i32, i32) {
    %c0_i32 = arith.constant 0 : i32
    %c0_i32_0 = arith.constant 0 : i32
    %c0_i32_1 = arith.constant 0 : i32
    return %c0_i32, %c0_i32_0 : i32, i32
  }
  func.func @transform_7(%arg0: i32) -> (i32, i32) {
    %c0_i32 = arith.constant 0 : i32
    %c0_i32_0 = arith.constant 0 : i32
    return %arg0, %c0_i32 : i32, i32
  }
}

</mosaic_0001>

<llo_original>
// kernel: tpu_custom_call.1
$region0: #{tpu_custom_call.1}
  #allocation0 [shape = 'u32[]', space=smem, size = 0x4, offset = 0x4, fixed_abs, tag = 'smem constant byte address 0x4 - core index']
  #allocation1 [shape = 'u32[72,128]{1,0:T(1,128)}', space=vmem, size = 0x9000, scoped, tag = 'internal scratch']
  %s0 = inlined_call_operand.vmem [shape: f32[256,32], index: 0, kind: input, shape index: {}]
  %s1 = inlined_call_operand.vmem [shape: bf16[32,64], index: 1, kind: input, shape index: {}]
  %s2 = inlined_call_operand.vmem [shape: f32[1,64], index: 2, kind: input, shape index: {}]
  %s3 = inlined_call_operand.vmem [shape: bf16[64,64], index: 3, kind: input, shape index: {}]
  %s4 = inlined_call_operand.vmem [shape: f32[1,64], index: 4, kind: input, shape index: {}]
  %s5 = inlined_call_operand.vmem [shape: bf16[64,16], index: 5, kind: input, shape index: {}]
  %s6 = inlined_call_operand.vmem [shape: f32[1,16], index: 6, kind: input, shape index: {}]
  %s7 = inlined_call_operand.vmem [shape: f32[256,16], index: 7, kind: output, shape index: {}]
  %s8 = sld [smem:[#allocation0]]
  $region38: #{tpu_custom_call.1} parent=0
    _
  %s10 = ssub.s32 1, %s8
  %s11 = scalar_select 0, %s10, %s8
  // Predicated region
  $region2: #{tpu_custom_call.1} parent=0 // pred_check
    _
  $region3: #{tpu_custom_call.1} parent=0 // pred_check_branch
    %13 = sbr.rel (0) target = $region5
  $region4: #{tpu_custom_call.1} parent=0 // pred_region
    _
  $region5: #{tpu_custom_call.1} parent=0 // pred_fallthru
    _
  // Predicated region
  $region6: #{tpu_custom_call.1} parent=0 // pred_check
    _
  $region7: #{tpu_custom_call.1} parent=0 // pred_check_branch
    %15 = sbr.rel (0) target = $region9
  $region8: #{tpu_custom_call.1} parent=0 // pred_region
    _
  $region9: #{tpu_custom_call.1} parent=0 // pred_fallthru
    _
  // Predicated region
  $region10: #{tpu_custom_call.1} parent=0 // pred_check
    _
  $region11: #{tpu_custom_call.1} parent=0 // pred_check_branch
    %17 = sbr.rel (0) target = $region13
  $region12: #{tpu_custom_call.1} parent=0 // pred_region
    _
  $region13: #{tpu_custom_call.1} parent=0 // pred_fallthru
    _
  // Predicated region
  $region14: #{tpu_custom_call.1} parent=0 // pred_check
    _
  $region15: #{tpu_custom_call.1} parent=0 // pred_check_branch
    %19 = sbr.rel (0) target = $region17
  $region16: #{tpu_custom_call.1} parent=0 // pred_region
    _
  $region17: #{tpu_custom_call.1} parent=0 // pred_fallthru
    _
  // Predicated region
  $region18: #{tpu_custom_call.1} parent=0 // pred_check
    _
  $region19: #{tpu_custom_call.1} parent=0 // pred_check_branch
    %21 = sbr.rel (0) target = $region21
  $region20: #{tpu_custom_call.1} parent=0 // pred_region
    _
  $region21: #{tpu_custom_call.1} parent=0 // pred_fallthru
    _
  // Predicated region
  $region22: #{tpu_custom_call.1} parent=0 // pred_check
    _
  $region23: #{tpu_custom_call.1} parent=0 // pred_check_branch
    %23 = sbr.rel (0) target = $region25
  $region24: #{tpu_custom_call.1} parent=0 // pred_region
    _
  $region25: #{tpu_custom_call.1} parent=0 // pred_fallthru
    _
  // Predicated region
  $region26: #{tpu_custom_call.1} parent=0 // pred_check
    _
  $region27: #{tpu_custom_call.1} parent=0 // pred_check_branch
    %25 = sbr.rel (0) target = $region29
  $region28: #{tpu_custom_call.1} parent=0 // pred_region
    _
  $region29: #{tpu_custom_call.1} parent=0 // pred_fallthru
    _
  %v27 = vld [vmem:[%s0] sm:$0xff]
  %v28 = vld [vmem:[%s0 + $0x8] sm:$0xff]
  %v29 = vld [vmem:[%s0 + $0x10] sm:$0xff]
  %v30 = vld [vmem:[%s0 + $0x18] sm:$0xff]
  %v31 = vld [vmem:[%s0 + $0x20] sm:$0xff]
  %v32 = vld [vmem:[%s0 + $0x28] sm:$0xff]
  %v33 = vld [vmem:[%s0 + $0x30] sm:$0xff]
  %v34 = vld [vmem:[%s0 + $0x38] sm:$0xff]
  %v35 = vld [vmem:[%s0 + $0x40] sm:$0xff]
  %v36 = vld [vmem:[%s0 + $0x48] sm:$0xff]
  %v37 = vld [vmem:[%s0 + $0x50] sm:$0xff]
  %v38 = vld [vmem:[%s0 + $0x58] sm:$0xff]
  %v39 = vld [vmem:[%s0 + $0x60] sm:$0xff]
  %v40 = vld [vmem:[%s0 + $0x68] sm:$0xff]
  %v41 = vld [vmem:[%s0 + $0x70] sm:$0xff]
  %v42 = vld [vmem:[%s0 + $0x78] sm:$0xff]
  %v43 = vld [vmem:[%s0 + $0x80] sm:$0xff]
  %v44 = vld [vmem:[%s0 + $0x88] sm:$0xff]
  %v45 = vld [vmem:[%s0 + $0x90] sm:$0xff]
  %v46 = vld [vmem:[%s0 + $0x98] sm:$0xff]
  %v47 = vld [vmem:[%s0 + $0xa0] sm:$0xff]
  %v48 = vld [vmem:[%s0 + $0xa8] sm:$0xff]
  %v49 = vld [vmem:[%s0 + $0xb0] sm:$0xff]
  %v50 = vld [vmem:[%s0 + $0xb8] sm:$0xff]
  %v51 = vld [vmem:[%s0 + $0xc0] sm:$0xff]
  %v52 = vld [vmem:[%s0 + $0xc8] sm:$0xff]
  %v53 = vld [vmem:[%s0 + $0xd0] sm:$0xff]
  %v54 = vld [vmem:[%s0 + $0xd8] sm:$0xff]
  %v55 = vld [vmem:[%s0 + $0xe0] sm:$0xff]
  %v56 = vld [vmem:[%s0 + $0xe8] sm:$0xff]
  %v57 = vld [vmem:[%s0 + $0xf0] sm:$0xff]
  %v58 = vld [vmem:[%s0 + $0xf8] sm:$0xff]
  %v59 = vpack.c.bf16 %v28, %v27
  %v60 = vpack.c.bf16 %v30, %v29
  %v61 = vpack.c.bf16 %v32, %v31
  %v62 = vpack.c.bf16 %v34, %v33
  %v63 = vpack.c.bf16 %v36, %v35
  %v64 = vpack.c.bf16 %v38, %v37
  %v65 = vpack.c.bf16 %v40, %v39
  %v66 = vpack.c.bf16 %v42, %v41
  %v67 = vpack.c.bf16 %v44, %v43
  %v68 = vpack.c.bf16 %v46, %v45
  %v69 = vpack.c.bf16 %v48, %v47
  %v70 = vpack.c.bf16 %v50, %v49
  %v71 = vpack.c.bf16 %v52, %v51
  %v72 = vpack.c.bf16 %v54, %v53
  %v73 = vpack.c.bf16 %v56, %v55
  %v74 = vpack.c.bf16 %v58, %v57
  %v75 = vld [vmem:[%s1] sm:$0xf]
  %v76 = vld [vmem:[%s1 + $0x4] sm:$0xf]
  %v77 = vld [vmem:[%s1 + $0x8] sm:$0xf]
  %v78 = vld [vmem:[%s1 + $0xc] sm:$0xf]
  %v79 = vld [vmem:[%s2] sm:$0x1]
  %v81 = vperm.slane %v79, 0
  %v87 = vunpack.c.l.b16 %v75
  %v88 = vunpack.c.l.b16 %v76
  %v89 = vunpack.c.l.b16 %v77
  %v90 = vunpack.c.l.b16 %v78
  %v91 = vpack.c.b16 %v88, %v87
  %v92 = vpack.c.b16 %v90, %v89
  %vm95 = vcmask 261120
  %v97 = vsel %vm95, %v59, 0
  %v100 = vsel %vm95, %v60, 0
  %v103 = vsel %vm95, %v61, 0
  %v106 = vsel %vm95, %v62, 0
  %v109 = vsel %vm95, %v63, 0
  %v112 = vsel %vm95, %v64, 0
  %v115 = vsel %vm95, %v65, 0
  %v118 = vsel %vm95, %v66, 0
  %v121 = vsel %vm95, %v67, 0
  %v124 = vsel %vm95, %v68, 0
  %v127 = vsel %vm95, %v69, 0
  %v130 = vsel %vm95, %v70, 0
  %v133 = vsel %vm95, %v71, 0
  %v136 = vsel %vm95, %v72, 0
  %v139 = vsel %vm95, %v73, 0
  %v142 = vsel %vm95, %v74, 0
  %144 = vmatpush.bf16.msra.mxu0 0
  %145 = vmatpush.bf16.msra.mxu0 0
  %146 = vmatpush.bf16.msra.mxu0 0
  %147 = vmatpush.bf16.msra.mxu0 0
  %148 = vmatpush.bf16.msra.mxu0 0
  %149 = vmatpush.bf16.msra.mxu0 0
  %150 = vmatpush.bf16.msra.mxu0 %v92
  %151 = vmatpush.bf16.msra.mxu0 %v91
  %152 = vmatmul.bf16.gmra.mxu0 %v97
  %v153 = vpop.f32.mrf.mxu0
  %v154 = vadd.f32 %v81, %v153
  %v155 = vpop.f32.mrf.mxu0
  %v156 = vadd.f32 %v81, %v155
  %157 = vmatmul.bf16.gmra.mxu0 %v100
  %v158 = vpop.f32.mrf.mxu0
  %v159 = vadd.f32 %v81, %v158
  %v160 = vpop.f32.mrf.mxu0
  %v161 = vadd.f32 %v81, %v160
  %162 = vmatmul.bf16.gmra.mxu0 %v103
  %v163 = vpop.f32.mrf.mxu0
  %v164 = vadd.f32 %v81, %v163
  %v165 = vpop.f32.mrf.mxu0
  %v166 = vadd.f32 %v81, %v165
  %167 = vmatmul.bf16.gmra.mxu0 %v106
  %v168 = vpop.f32.mrf.mxu0
  %v169 = vadd.f32 %v81, %v168
  %v170 = vpop.f32.mrf.mxu0
  %v171 = vadd.f32 %v81, %v170
  %172 = vmatmul.bf16.gmra.mxu0 %v109
  %v173 = vpop.f32.mrf.mxu0
  %v174 = vadd.f32 %v81, %v173
  %v175 = vpop.f32.mrf.mxu0
  %v176 = vadd.f32 %v81, %v175
  %177 = vmatmul.bf16.gmra.mxu0 %v112
  %v178 = vpop.f32.mrf.mxu0
  %v179 = vadd.f32 %v81, %v178
  %v180 = vpop.f32.mrf.mxu0
  %v181 = vadd.f32 %v81, %v180
  %182 = vmatmul.bf16.gmra.mxu0 %v115
  %v183 = vpop.f32.mrf.mxu0
  %v184 = vadd.f32 %v81, %v183
  %v185 = vpop.f32.mrf.mxu0
  %v186 = vadd.f32 %v81, %v185
  %187 = vmatmul.bf16.gmra.mxu0 %v118
  %v188 = vpop.f32.mrf.mxu0
  %v189 = vadd.f32 %v81, %v188
  %v190 = vpop.f32.mrf.mxu0
  %v191 = vadd.f32 %v81, %v190
  %192 = vmatmul.bf16.gmra.mxu0 %v121
  %v193 = vpop.f32.mrf.mxu0
  %v194 = vadd.f32 %v81, %v193
  %v195 = vpop.f32.mrf.mxu0
  %v196 = vadd.f32 %v81, %v195
  %197 = vmatmul.bf16.gmra.mxu0 %v124
  %v198 = vpop.f32.mrf.mxu0
  %v199 = vadd.f32 %v81, %v198
  %v200 = vpop.f32.mrf.mxu0
  %v201 = vadd.f32 %v81, %v200
  %202 = vmatmul.bf16.gmra.mxu0 %v127
  %v203 = vpop.f32.mrf.mxu0
  %v204 = vadd.f32 %v81, %v203
  %v205 = vpop.f32.mrf.mxu0
  %v206 = vadd.f32 %v81, %v205
  %207 = vmatmul.bf16.gmra.mxu0 %v130
  %v208 = vpop.f32.mrf.mxu0
  %v209 = vadd.f32 %v81, %v208
  %v210 = vpop.f32.mrf.mxu0
  %v211 = vadd.f32 %v81, %v210
  %212 = vmatmul.bf16.gmra.mxu0 %v133
  %v213 = vpop.f32.mrf.mxu0
  %v214 = vadd.f32 %v81, %v213
  %v215 = vpop.f32.mrf.mxu0
  %v216 = vadd.f32 %v81, %v215
  %217 = vmatmul.bf16.gmra.mxu0 %v136
  %v218 = vpop.f32.mrf.mxu0
  %v219 = vadd.f32 %v81, %v218
  %v220 = vpop.f32.mrf.mxu0
  %v221 = vadd.f32 %v81, %v220
  %222 = vmatmul.bf16.gmra.mxu0 %v139
  %v223 = vpop.f32.mrf.mxu0
  %v224 = vadd.f32 %v81, %v223
  %v225 = vpop.f32.mrf.mxu0
  %v226 = vadd.f32 %v81, %v225
  %227 = vmatmul.bf16.gmra.mxu0 %v142
  %v228 = vpop.f32.mrf.mxu0
  %v229 = vadd.f32 %v81, %v228
  %v230 = vpop.f32.mrf.mxu0
  %v231 = vadd.f32 %v81, %v230
  %232 = vdwg.mxu0
  %v233 = vmax.f32 %v154, 0.0
  %v234 = vmax.f32 %v156, 0.0
  %v235 = vmax.f32 %v159, 0.0
  %v236 = vmax.f32 %v161, 0.0
  %v237 = vmax.f32 %v164, 0.0
  %v238 = vmax.f32 %v166, 0.0
  %v239 = vmax.f32 %v169, 0.0
  %v240 = vmax.f32 %v171, 0.0
  %v241 = vmax.f32 %v174, 0.0
  %v242 = vmax.f32 %v176, 0.0
  %v243 = vmax.f32 %v179, 0.0
  %v244 = vmax.f32 %v181, 0.0
  %v245 = vmax.f32 %v184, 0.0
  %v246 = vmax.f32 %v186, 0.0
  %v247 = vmax.f32 %v189, 0.0
  %v248 = vmax.f32 %v191, 0.0
  %v249 = vmax.f32 %v194, 0.0
  %v250 = vmax.f32 %v196, 0.0
  %v251 = vmax.f32 %v199, 0.0
  %v252 = vmax.f32 %v201, 0.0
  %v253 = vmax.f32 %v204, 0.0
  %v254 = vmax.f32 %v206, 0.0
  %v255 = vmax.f32 %v209, 0.0
  %v256 = vmax.f32 %v211, 0.0
  %v257 = vmax.f32 %v214, 0.0
  %v258 = vmax.f32 %v216, 0.0
  %v259 = vmax.f32 %v219, 0.0
  %v260 = vmax.f32 %v221, 0.0
  %v261 = vmax.f32 %v224, 0.0
  %v262 = vmax.f32 %v226, 0.0
  %v263 = vmax.f32 %v229, 0.0
  %v264 = vmax.f32 %v231, 0.0
  %v265 = vpack.c.bf16 %v234, %v233
  %v266 = vpack.c.bf16 %v236, %v235
  %v267 = vpack.c.bf16 %v238, %v237
  %v268 = vpack.c.bf16 %v240, %v239
  %v269 = vpack.c.bf16 %v242, %v241
  %v270 = vpack.c.bf16 %v244, %v243
  %v271 = vpack.c.bf16 %v246, %v245
  %v272 = vpack.c.bf16 %v248, %v247
  %v273 = vpack.c.bf16 %v250, %v249
  %v274 = vpack.c.bf16 %v252, %v251
  %v275 = vpack.c.bf16 %v254, %v253
  %v276 = vpack.c.bf16 %v256, %v255
  %v277 = vpack.c.bf16 %v258, %v257
  %v278 = vpack.c.bf16 %v260, %v259
  %v279 = vpack.c.bf16 %v262, %v261
  %v280 = vpack.c.bf16 %v264, %v263
  %v281 = vld [vmem:[%s3] sm:$0xf]
  %v282 = vld [vmem:[%s3 + $0x4] sm:$0xf]
  %v283 = vld [vmem:[%s3 + $0x8] sm:$0xf]
  %v284 = vld [vmem:[%s3 + $0xc] sm:$0xf]
  %v285 = vld [vmem:[%s3 + $0x10] sm:$0xf]
  %v286 = vld [vmem:[%s3 + $0x14] sm:$0xf]
  %v287 = vld [vmem:[%s3 + $0x18] sm:$0xf]
  %v288 = vld [vmem:[%s3 + $0x1c] sm:$0xf]
  %v289 = vld [vmem:[%s4] sm:$0x1]
  %v291 = vperm.slane %v289, 0
  %v301 = vunpack.c.l.b16 %v281
  %v302 = vunpack.c.l.b16 %v282
  %v303 = vunpack.c.l.b16 %v283
  %v304 = vunpack.c.l.b16 %v284
  %v305 = vunpack.c.l.b16 %v285
  %v306 = vunpack.c.l.b16 %v286
  %v307 = vunpack.c.l.b16 %v287
  %v308 = vunpack.c.l.b16 %v288
  %v309 = vpack.c.b16 %v302, %v301
  %v310 = vpack.c.b16 %v304, %v303
  %v311 = vpack.c.b16 %v306, %v305
  %v312 = vpack.c.b16 %v308, %v307
  %vm317 = vcmask 523264
  %v319 = vsel %vm317, %v265, 0
  %v322 = vsel %vm317, %v266, 0
  %v325 = vsel %vm317, %v267, 0
  %v328 = vsel %vm317, %v268, 0
  %v331 = vsel %vm317, %v269, 0
  %v334 = vsel %vm317, %v270, 0
  %v337 = vsel %vm317, %v271, 0
  %v340 = vsel %vm317, %v272, 0
  %v343 = vsel %vm317, %v273, 0
  %v346 = vsel %vm317, %v274, 0
  %v349 = vsel %vm317, %v275, 0
  %v352 = vsel %vm317, %v276, 0
  %v355 = vsel %vm317, %v277, 0
  %v358 = vsel %vm317, %v278, 0
  %v361 = vsel %vm317, %v279, 0
  %v364 = vsel %vm317, %v280, 0
  %366 = vmatpush.bf16.msra.mxu0 0
  %367 = vmatpush.bf16.msra.mxu0 0
  %368 = vmatpush.bf16.msra.mxu0 0
  %369 = vmatpush.bf16.msra.mxu0 0
  %370 = vmatpush.bf16.msra.mxu0 %v312
  %371 = vmatpush.bf16.msra.mxu0 %v311
  %372 = vmatpush.bf16.msra.mxu0 %v310
  %373 = vmatpush.bf16.msra.mxu0 %v309
  %374 = vmatmul.bf16.gmra.mxu0 %v319
  %v375 = vpop.f32.mrf.mxu0
  %v376 = vadd.f32 %v291, %v375
  %v377 = vpop.f32.mrf.mxu0
  %v378 = vadd.f32 %v291, %v377
  %379 = vmatmul.bf16.gmra.mxu0 %v322
  %v380 = vpop.f32.mrf.mxu0
  %v381 = vadd.f32 %v291, %v380
  %v382 = vpop.f32.mrf.mxu0
  %v383 = vadd.f32 %v291, %v382
  %384 = vmatmul.bf16.gmra.mxu0 %v325
  %v385 = vpop.f32.mrf.mxu0
  %v386 = vadd.f32 %v291, %v385
  %v387 = vpop.f32.mrf.mxu0
  %v388 = vadd.f32 %v291, %v387
  %389 = vmatmul.bf16.gmra.mxu0 %v328
  %v390 = vpop.f32.mrf.mxu0
  %v391 = vadd.f32 %v291, %v390
  %v392 = vpop.f32.mrf.mxu0
  %v393 = vadd.f32 %v291, %v392
  %394 = vmatmul.bf16.gmra.mxu0 %v331
  %v395 = vpop.f32.mrf.mxu0
  %v396 = vadd.f32 %v291, %v395
  %v397 = vpop.f32.mrf.mxu0
  %v398 = vadd.f32 %v291, %v397
  %399 = vmatmul.bf16.gmra.mxu0 %v334
  %v400 = vpop.f32.mrf.mxu0
  %v401 = vadd.f32 %v291, %v400
  %v402 = vpop.f32.mrf.mxu0
  %v403 = vadd.f32 %v291, %v402
  %404 = vmatmul.bf16.gmra.mxu0 %v337
  %v405 = vpop.f32.mrf.mxu0
  %v406 = vadd.f32 %v291, %v405
  %v407 = vpop.f32.mrf.mxu0
  %v408 = vadd.f32 %v291, %v407
  %409 = vmatmul.bf16.gmra.mxu0 %v340
  %v410 = vpop.f32.mrf.mxu0
  %v411 = vadd.f32 %v291, %v410
  %v412 = vpop.f32.mrf.mxu0
  %v413 = vadd.f32 %v291, %v412
  %414 = vmatmul.bf16.gmra.mxu0 %v343
  %v415 = vpop.f32.mrf.mxu0
  %v416 = vadd.f32 %v291, %v415
  %v417 = vpop.f32.mrf.mxu0
  %v418 = vadd.f32 %v291, %v417
  %419 = vmatmul.bf16.gmra.mxu0 %v346
  %v420 = vpop.f32.mrf.mxu0
  %v421 = vadd.f32 %v291, %v420
  %v422 = vpop.f32.mrf.mxu0
  %v423 = vadd.f32 %v291, %v422
  %424 = vmatmul.bf16.gmra.mxu0 %v349
  %v425 = vpop.f32.mrf.mxu0
  %v426 = vadd.f32 %v291, %v425
  %v427 = vpop.f32.mrf.mxu0
  %v428 = vadd.f32 %v291, %v427
  %429 = vmatmul.bf16.gmra.mxu0 %v352
  %v430 = vpop.f32.mrf.mxu0
  %v431 = vadd.f32 %v291, %v430
  %v432 = vpop.f32.mrf.mxu0
  %v433 = vadd.f32 %v291, %v432
  %434 = vmatmul.bf16.gmra.mxu0 %v355
  %v435 = vpop.f32.mrf.mxu0
  %v436 = vadd.f32 %v291, %v435
  %v437 = vpop.f32.mrf.mxu0
  %v438 = vadd.f32 %v291, %v437
  %439 = vmatmul.bf16.gmra.mxu0 %v358
  %v440 = vpop.f32.mrf.mxu0
  %v441 = vadd.f32 %v291, %v440
  %v442 = vpop.f32.mrf.mxu0
  %v443 = vadd.f32 %v291, %v442
  %444 = vmatmul.bf16.gmra.mxu0 %v361
  %v445 = vpop.f32.mrf.mxu0
  %v446 = vadd.f32 %v291, %v445
  %v447 = vpop.f32.mrf.mxu0
  %v448 = vadd.f32 %v291, %v447
  %449 = vmatmul.bf16.gmra.mxu0 %v364
  %v450 = vpop.f32.mrf.mxu0
  %v451 = vadd.f32 %v291, %v450
  %v452 = vpop.f32.mrf.mxu0
  %v453 = vadd.f32 %v291, %v452
  %454 = vdwg.mxu0
  %v455 = vmax.f32 %v376, 0.0
  %v456 = vmax.f32 %v378, 0.0
  %v457 = vmax.f32 %v381, 0.0
  %v458 = vmax.f32 %v383, 0.0
  %v459 = vmax.f32 %v386, 0.0
  %v460 = vmax.f32 %v388, 0.0
  %v461 = vmax.f32 %v391, 0.0
  %v462 = vmax.f32 %v393, 0.0
  %v463 = vmax.f32 %v396, 0.0
  %v464 = vmax.f32 %v398, 0.0
  %v465 = vmax.f32 %v401, 0.0
  %v466 = vmax.f32 %v403, 0.0
  %v467 = vmax.f32 %v406, 0.0
  %v468 = vmax.f32 %v408, 0.0
  %v469 = vmax.f32 %v411, 0.0
  %v470 = vmax.f32 %v413, 0.0
  %v471 = vmax.f32 %v416, 0.0
  %v472 = vmax.f32 %v418, 0.0
  %v473 = vmax.f32 %v421, 0.0
  %v474 = vmax.f32 %v423, 0.0
  %v475 = vmax.f32 %v426, 0.0
  %v476 = vmax.f32 %v428, 0.0
  %v477 = vmax.f32 %v431, 0.0
  %v478 = vmax.f32 %v433, 0.0
  %v479 = vmax.f32 %v436, 0.0
  %v480 = vmax.f32 %v438, 0.0
  %v481 = vmax.f32 %v441, 0.0
  %v482 = vmax.f32 %v443, 0.0
  %v483 = vmax.f32 %v446, 0.0
  %v484 = vmax.f32 %v448, 0.0
  %v485 = vmax.f32 %v451, 0.0
  %v486 = vmax.f32 %v453, 0.0
  %v487 = vpack.c.bf16 %v456, %v455
  %v488 = vpack.c.bf16 %v458, %v457
  %v489 = vpack.c.bf16 %v460, %v459
  %v490 = vpack.c.bf16 %v462, %v461
  %v491 = vpack.c.bf16 %v464, %v463
  %v492 = vpack.c.bf16 %v466, %v465
  %v493 = vpack.c.bf16 %v468, %v467
  %v494 = vpack.c.bf16 %v470, %v469
  %v495 = vpack.c.bf16 %v472, %v471
  %v496 = vpack.c.bf16 %v474, %v473
  %v497 = vpack.c.bf16 %v476, %v475
  %v498 = vpack.c.bf16 %v478, %v477
  %v499 = vpack.c.bf16 %v480, %v479
  %v500 = vpack.c.bf16 %v482, %v481
  %v501 = vpack.c.bf16 %v484, %v483
  %v502 = vpack.c.bf16 %v486, %v485
  %v503 = vld [vmem:[%s5] sm:$0xf]
  %v504 = vld [vmem:[%s5 + $0x4] sm:$0xf]
  %v505 = vld [vmem:[%s5 + $0x8] sm:$0xf]
  %v506 = vld [vmem:[%s5 + $0xc] sm:$0xf]
  %v507 = vld [vmem:[%s5 + $0x10] sm:$0xf]
  %v508 = vld [vmem:[%s5 + $0x14] sm:$0xf]
  %v509 = vld [vmem:[%s5 + $0x18] sm:$0xf]
  %v510 = vld [vmem:[%s5 + $0x1c] sm:$0xf]
  %v511 = vld [vmem:[%s6] sm:$0x1]
  %v513 = vperm.slane %v511, 0
  %v523 = vunpack.c.l.b16 %v503
  %v524 = vunpack.c.l.b16 %v504
  %v525 = vunpack.c.l.b16 %v505
  %v526 = vunpack.c.l.b16 %v506
  %v527 = vunpack.c.l.b16 %v507
  %v528 = vunpack.c.l.b16 %v508
  %v529 = vunpack.c.l.b16 %v509
  %v530 = vunpack.c.l.b16 %v510
  %v531 = vpack.c.b16 %v524, %v523
  %v532 = vpack.c.b16 %v526, %v525
  %v533 = vpack.c.b16 %v528, %v527
  %v534 = vpack.c.b16 %v530, %v529
  %v540 = vsel %vm317, %v487, 0
  %v543 = vsel %vm317, %v488, 0
  %v546 = vsel %vm317, %v489, 0
  %v549 = vsel %vm317, %v490, 0
  %v552 = vsel %vm317, %v491, 0
  %v555 = vsel %vm317, %v492, 0
  %v558 = vsel %vm317, %v493, 0
  %v561 = vsel %vm317, %v494, 0
  %v564 = vsel %vm317, %v495, 0
  %v567 = vsel %vm317, %v496, 0
  %v570 = vsel %vm317, %v497, 0
  %v573 = vsel %vm317, %v498, 0
  %v576 = vsel %vm317, %v499, 0
  %v579 = vsel %vm317, %v500, 0
  %v582 = vsel %vm317, %v501, 0
  %v585 = vsel %vm317, %v502, 0
  %587 = vmatpush.bf16.msra.mxu0 0
  %588 = vmatpush.bf16.msra.mxu0 0
  %589 = vmatpush.bf16.msra.mxu0 0
  %590 = vmatpush.bf16.msra.mxu0 0
  %591 = vmatpush.bf16.msra.mxu0 %v534
  %592 = vmatpush.bf16.msra.mxu0 %v533
  %593 = vmatpush.bf16.msra.mxu0 %v532
  %594 = vmatpush.bf16.msra.mxu0 %v531
  %595 = vmatmul.bf16.gmra.mxu0 %v540
  %v596 = vpop.f32.mrf.mxu0
  %v597 = vadd.f32 %v513, %v596
  %v598 = vpop.f32.mrf.mxu0
  %v599 = vadd.f32 %v513, %v598
  %600 = vmatmul.bf16.gmra.mxu0 %v543
  %v601 = vpop.f32.mrf.mxu0
  %v602 = vadd.f32 %v513, %v601
  %v603 = vpop.f32.mrf.mxu0
  %v604 = vadd.f32 %v513, %v603
  %605 = vmatmul.bf16.gmra.mxu0 %v546
  %v606 = vpop.f32.mrf.mxu0
  %v607 = vadd.f32 %v513, %v606
  %v608 = vpop.f32.mrf.mxu0
  %v609 = vadd.f32 %v513, %v608
  %610 = vmatmul.bf16.gmra.mxu0 %v549
  %v611 = vpop.f32.mrf.mxu0
  %v612 = vadd.f32 %v513, %v611
  %v613 = vpop.f32.mrf.mxu0
  %v614 = vadd.f32 %v513, %v613
  %615 = vmatmul.bf16.gmra.mxu0 %v552
  %v616 = vpop.f32.mrf.mxu0
  %v617 = vadd.f32 %v513, %v616
  %v618 = vpop.f32.mrf.mxu0
  %v619 = vadd.f32 %v513, %v618
  %620 = vmatmul.bf16.gmra.mxu0 %v555
  %v621 = vpop.f32.mrf.mxu0
  %v622 = vadd.f32 %v513, %v621
  %v623 = vpop.f32.mrf.mxu0
  %v624 = vadd.f32 %v513, %v623
  %625 = vmatmul.bf16.gmra.mxu0 %v558
  %v626 = vpop.f32.mrf.mxu0
  %v627 = vadd.f32 %v513, %v626
  %v628 = vpop.f32.mrf.mxu0
  %v629 = vadd.f32 %v513, %v628
  %630 = vmatmul.bf16.gmra.mxu0 %v561
  %v631 = vpop.f32.mrf.mxu0
  %v632 = vadd.f32 %v513, %v631
  %v633 = vpop.f32.mrf.mxu0
  %v634 = vadd.f32 %v513, %v633
  %635 = vmatmul.bf16.gmra.mxu0 %v564
  %v636 = vpop.f32.mrf.mxu0
  %v637 = vadd.f32 %v513, %v636
  %v638 = vpop.f32.mrf.mxu0
  %v639 = vadd.f32 %v513, %v638
  %640 = vmatmul.bf16.gmra.mxu0 %v567
  %v641 = vpop.f32.mrf.mxu0
  %v642 = vadd.f32 %v513, %v641
  %v643 = vpop.f32.mrf.mxu0
  %v644 = vadd.f32 %v513, %v643
  %645 = vmatmul.bf16.gmra.mxu0 %v570
  %v646 = vpop.f32.mrf.mxu0
  %v647 = vadd.f32 %v513, %v646
  %v648 = vpop.f32.mrf.mxu0
  %v649 = vadd.f32 %v513, %v648
  %650 = vmatmul.bf16.gmra.mxu0 %v573
  %v651 = vpop.f32.mrf.mxu0
  %v652 = vadd.f32 %v513, %v651
  %v653 = vpop.f32.mrf.mxu0
  %v654 = vadd.f32 %v513, %v653
  %655 = vmatmul.bf16.gmra.mxu0 %v576
  %v656 = vpop.f32.mrf.mxu0
  %v657 = vadd.f32 %v513, %v656
  %v658 = vpop.f32.mrf.mxu0
  %v659 = vadd.f32 %v513, %v658
  %660 = vmatmul.bf16.gmra.mxu0 %v579
  %v661 = vpop.f32.mrf.mxu0
  %v662 = vadd.f32 %v513, %v661
  %v663 = vpop.f32.mrf.mxu0
  %v664 = vadd.f32 %v513, %v663
  %665 = vmatmul.bf16.gmra.mxu0 %v582
  %v666 = vpop.f32.mrf.mxu0
  %v667 = vadd.f32 %v513, %v666
  %v668 = vpop.f32.mrf.mxu0
  %v669 = vadd.f32 %v513, %v668
  %670 = vmatmul.bf16.gmra.mxu0 %v585
  %v671 = vpop.f32.mrf.mxu0
  %v672 = vadd.f32 %v513, %v671
  %v673 = vpop.f32.mrf.mxu0
  %v674 = vadd.f32 %v513, %v673
  %675 = vdwg.mxu0
  %vm676 = vcmask 130048
  %677 = vst.msk [vmem:[%s7] sm:$0xff] %vm676, %v597
  %678 = vst.msk [vmem:[%s7 + $0x8] sm:$0xff] %vm676, %v599
  %679 = vst.msk [vmem:[%s7 + $0x10] sm:$0xff] %vm676, %v602
  %680 = vst.msk [vmem:[%s7 + $0x18] sm:$0xff] %vm676, %v604
  %681 = vst.msk [vmem:[%s7 + $0x20] sm:$0xff] %vm676, %v607
  %682 = vst.msk [vmem:[%s7 + $0x28] sm:$0xff] %vm676, %v609
  %683 = vst.msk [vmem:[%s7 + $0x30] sm:$0xff] %vm676, %v612
  %684 = vst.msk [vmem:[%s7 + $0x38] sm:$0xff] %vm676, %v614
  %685 = vst.msk [vmem:[%s7 + $0x40] sm:$0xff] %vm676, %v617
  %686 = vst.msk [vmem:[%s7 + $0x48] sm:$0xff] %vm676, %v619
  %687 = vst.msk [vmem:[%s7 + $0x50] sm:$0xff] %vm676, %v622
  %688 = vst.msk [vmem:[%s7 + $0x58] sm:$0xff] %vm676, %v624
  %689 = vst.msk [vmem:[%s7 + $0x60] sm:$0xff] %vm676, %v627
  %690 = vst.msk [vmem:[%s7 + $0x68] sm:$0xff] %vm676, %v629
  %691 = vst.msk [vmem:[%s7 + $0x70] sm:$0xff] %vm676, %v632
  %692 = vst.msk [vmem:[%s7 + $0x78] sm:$0xff] %vm676, %v634
  %693 = vst.msk [vmem:[%s7 + $0x80] sm:$0xff] %vm676, %v637
  %694 = vst.msk [vmem:[%s7 + $0x88] sm:$0xff] %vm676, %v639
  %695 = vst.msk [vmem:[%s7 + $0x90] sm:$0xff] %vm676, %v642
  %696 = vst.msk [vmem:[%s7 + $0x98] sm:$0xff] %vm676, %v644
  %697 = vst.msk [vmem:[%s7 + $0xa0] sm:$0xff] %vm676, %v647
  %698 = vst.msk [vmem:[%s7 + $0xa8] sm:$0xff] %vm676, %v649
  %699 = vst.msk [vmem:[%s7 + $0xb0] sm:$0xff] %vm676, %v652
  %700 = vst.msk [vmem:[%s7 + $0xb8] sm:$0xff] %vm676, %v654
  %701 = vst.msk [vmem:[%s7 + $0xc0] sm:$0xff] %vm676, %v657
  %702 = vst.msk [vmem:[%s7 + $0xc8] sm:$0xff] %vm676, %v659
  %703 = vst.msk [vmem:[%s7 + $0xd0] sm:$0xff] %vm676, %v662
  %704 = vst.msk [vmem:[%s7 + $0xd8] sm:$0xff] %vm676, %v664
  %705 = vst.msk [vmem:[%s7 + $0xe0] sm:$0xff] %vm676, %v667
  %706 = vst.msk [vmem:[%s7 + $0xe8] sm:$0xff] %vm676, %v669
  %707 = vst.msk [vmem:[%s7 + $0xf0] sm:$0xff] %vm676, %v672
  %708 = vst.msk [vmem:[%s7 + $0xf8] sm:$0xff] %vm676, %v674
  // Predicated region
  $region30: #{tpu_custom_call.1} parent=0 // pred_check
    _
  $region31: #{tpu_custom_call.1} parent=0 // pred_check_branch
    %710 = sbr.rel (0) target = $region33
  $region32: #{tpu_custom_call.1} parent=0 // pred_region
    _
  $region33: #{tpu_custom_call.1} parent=0 // pred_fallthru
    _
  // Predicated region
  $region34: #{tpu_custom_call.1} parent=0 // pred_check
    _
  $region35: #{tpu_custom_call.1} parent=0 // pred_check_branch
    %712 = sbr.rel (0) target = $region37
  $region36: #{tpu_custom_call.1} parent=0 // pred_region
    _
  $region37: #{tpu_custom_call.1} parent=0 // pred_fallthru
    _

</llo_original>
